<compile_context>
chip_gen: v7x
topology: tpu7x:2x2x1
jax: 0.10.0
libtpu: 0.0.40
codegen_flags: <defaults>
</compile_context>

<pallas_src>
import functools

import jax
import jax.numpy as jnp
from jax import lax
from jax.experimental import pallas as pl
from jax.experimental.pallas import tpu as pltpu

_EPS = 1e-12  # matches torch.nn.functional.normalize default eps


def _l2_normalize(x):
    # x / max(||x||, eps)  ==  x * rsqrt(max(sum(x^2), eps^2))   (rsqrt -> EUP)
    sumsq = jnp.sum(x * x, axis=1, keepdims=True)
    return x * lax.rsqrt(jnp.maximum(sumsq, _EPS * _EPS))


def _dot_nt(a, b):
    # (M, D) x (N, D) -> (M, N), contracting dim 1 of both (no transpose).
    return lax.dot_general(
        a, b, dimension_numbers=(((1,), (1,)), ((), ())),
        preferred_element_type=jnp.float32)


def _contrastive_kernel(a_ref, cmb_ref, out_ref, acc_ref, cn_ref, *,
                        temperature, batch_size, b_pad, num_neg,
                        needs_col_mask, needs_row_mask):
    step = pl.program_id(0)
    tm = a_ref.shape[0]
    c_pad = cn_ref.shape[0]
    inv_t = jnp.float32(1.0 / temperature)

    @pl.when(step == 0)
    def _init():
        acc_ref[...] = jnp.zeros_like(acc_ref)
        # Normalize b (+negatives) exactly once; padded zero rows stay zero.
        cn_ref[...] = _l2_normalize(cmb_ref[...].astype(jnp.float32))

    # Normalize this row tile; fold 1/T into the (small) LHS once.
    a_n = _l2_normalize(a_ref[...].astype(jnp.float32)) * inv_t         # (tm, D)

    # All logits (b columns then negative columns) in one MXU pass, already /T.
    logits = _dot_nt(a_n, cn_ref[...])                                  # (tm, c_pad)

    # Positive logits: matching rows of normalized b for this row tile.
    row0 = pl.multiple_of(step * tm, tm)
    b_match = cn_ref[pl.ds(row0, tm), :]                                # (tm, D)
    pos = jnp.sum(a_n * b_match, axis=1, keepdims=True)                 # (tm, 1)

    if needs_col_mask:
        # Padded columns (zero vectors) would contribute spurious exp(0) terms.
        col = lax.broadcasted_iota(jnp.int32, (1, c_pad), 1)
        valid = (col < batch_size) | ((col >= b_pad) & (col < b_pad + num_neg))
        bias = jnp.where(valid, 0.0, -1e30).astype(jnp.float32)         # (1, c_pad)
        logits = logits + bias                                          # sublane bcast

    row_max = jnp.max(logits, axis=1, keepdims=True)
    sum_exp = jnp.sum(jnp.exp(logits - row_max), axis=1, keepdims=True)
    per_row = (jnp.log(sum_exp) + row_max) - pos                        # (tm, 1)

    if needs_row_mask:
        # Mask padded a rows out of the loss sum.
        row_ids = row0 + lax.broadcasted_iota(jnp.int32, (tm, 1), 0)
        per_row = jnp.where(row_ids < batch_size, per_row, 0.0)

    acc_ref[...] += jnp.sum(per_row, axis=(0, 1), keepdims=True)

    @pl.when(step == pl.num_programs(0) - 1)
    def _finalize():
        out_ref[...] = acc_ref[...] * jnp.float32(1.0 / batch_size)


def _round_up(x, m):
    return (x + m - 1) // m * m


def _choose_row_tile(batch, dim, num_neg):
    """Largest multiple-of-8 row tile (<=512) whose working set fits ~24 MiB."""
    budget = 24 * 1024 * 1024
    resident = 2 * (batch + num_neg) * dim * 4      # raw b/neg input + normalized cache
    tm = 512
    while tm > 8:
        need = (resident
                + 2 * tm * dim * 4                  # double-buffered a tile
                + 4 * tm * (batch + num_neg) * 4)   # logits + exp temporaries
        if need <= budget:
            break
        tm //= 2
    return max(8, min(tm, _round_up(batch, 8)))


def contrastive_loss(embeddings_a, embeddings_b, negatives=None,
                     temperature=0.07, use_hard_negatives=False, row_block=None):
    """Pallas equivalent of ContrastiveLoss.forward. Returns a scalar loss."""
    batch, dim = embeddings_a.shape
    has_neg = bool(use_hard_negatives and negatives is not None)
    num_neg = int(negatives.shape[0]) if has_neg else 0

    if row_block is None:
        tm = _choose_row_tile(batch, dim, num_neg)
    else:
        tm = int(row_block)
        assert tm % 8 == 0, "row_block must be a multiple of 8"

    b_pad = _round_up(batch, tm)
    neg_pad = _round_up(num_neg, 8) if has_neg else 0
    c_pad = b_pad + neg_pad

    if b_pad != batch:
        pad = ((0, b_pad - batch), (0, 0))
        a_in = jnp.pad(embeddings_a, pad)
        b_in = jnp.pad(embeddings_b, pad)
    else:
        a_in, b_in = embeddings_a, embeddings_b

    if has_neg:
        neg_in = (negatives if neg_pad == num_neg
                  else jnp.pad(negatives, ((0, neg_pad - num_neg), (0, 0))))
        cmb = jnp.concatenate([b_in, neg_in], axis=0)                   # (c_pad, D)
    else:
        cmb = b_in

    grid = (b_pad // tm,)

    kernel = functools.partial(
        _contrastive_kernel,
        temperature=float(temperature),
        batch_size=batch,
        b_pad=b_pad,
        num_neg=num_neg,
        needs_col_mask=(b_pad > batch) or (c_pad > b_pad + num_neg),
        needs_row_mask=(b_pad > batch))

    in_specs = [
        pl.BlockSpec((tm, dim), lambda i: (i, 0)),      # a: row-tiled, pipelined
        pl.BlockSpec((c_pad, dim), lambda i: (0, 0)),   # b(+neg): fully resident
    ]
    scratch = [
        pltpu.VMEM((1, 1), jnp.float32),                # running loss sum
        pltpu.VMEM((c_pad, dim), jnp.float32),          # cached normalized b(+neg)
    ]

    itemsize = jnp.dtype(embeddings_a.dtype).itemsize
    cost = pl.CostEstimate(
        flops=2 * batch * (batch + num_neg) * dim + 8 * (2 * batch + num_neg) * dim,
        transcendentals=batch * (batch + num_neg) + 3 * batch + num_neg,
        bytes_accessed=(b_pad + c_pad) * dim * itemsize + 4,
    )

    vmem_est = (2 * tm * dim * 4 + 3 * c_pad * dim * 4
                + 4 * tm * c_pad * 4 + (1 << 20))
    cp_kwargs = dict(dimension_semantics=("arbitrary",))
    if vmem_est > (16 << 20):
        cp_kwargs["vmem_limit_bytes"] = int(min(vmem_est, 64 << 20))

    result = pl.pallas_call(
        kernel,
        out_shape=jax.ShapeDtypeStruct((1, 1), jnp.float32),
        grid_spec=pltpu.PrefetchScalarGridSpec(
            num_scalar_prefetch=0,
            grid=grid,
            in_specs=in_specs,
            out_specs=pl.BlockSpec((1, 1), lambda i: (0, 0)),
            scratch_shapes=scratch,
        ),
        compiler_params=pltpu.CompilerParams(**cp_kwargs),
        cost_estimate=cost,
    )(a_in, cmb)
    return result[0, 0]


def _reference_loss(a, b, negatives=None, temperature=0.07,
                    use_hard_negatives=False):
    """Pure-JAX reference mirroring the PyTorch module (for verification)."""
    a = a.astype(jnp.float32)
    b = b.astype(jnp.float32)
    a_n = a / jnp.maximum(jnp.linalg.norm(a, axis=1, keepdims=True), _EPS)
    b_n = b / jnp.maximum(jnp.linalg.norm(b, axis=1, keepdims=True), _EPS)
    logits = a_n @ b_n.T / temperature
    if use_hard_negatives and negatives is not None:
        neg = negatives.astype(jnp.float32)
        neg_n = neg / jnp.maximum(jnp.linalg.norm(neg, axis=1, keepdims=True), _EPS)
        logits = jnp.concatenate([logits, a_n @ neg_n.T / temperature], axis=1)
    labels = jnp.arange(a.shape[0])
    log_probs = logits - jax.scipy.special.logsumexp(logits, axis=1, keepdims=True)
    return -jnp.mean(log_probs[jnp.arange(a.shape[0]), labels])


if __name__ == "__main__":
    temperature = 0.07
    key = jax.random.PRNGKey(0)
    ka, kb, kn, kc, kd, ke = jax.random.split(key, 6)

    # Case 1: default path (no hard negatives), batch=8, dim=32.
    emb_a = jax.random.normal(ka, (8, 32), dtype=jnp.float32)
    emb_b = jax.random.normal(kb, (8, 32), dtype=jnp.float32)
    negatives = jax.random.normal(kn, (8, 32), dtype=jnp.float32)

    loss = jax.block_until_ready(
        contrastive_loss(emb_a, emb_b, temperature=temperature))
    ref = _reference_loss(emb_a, emb_b, temperature=temperature)
    assert jnp.allclose(loss, ref, rtol=1e-5, atol=1e-5), (loss, ref)

    # Case 2: hard-negatives path (aligned shapes).
    loss_hn = jax.block_until_ready(
        contrastive_loss(emb_a, emb_b, negatives, temperature=temperature,
                         use_hard_negatives=True))
    ref_hn = _reference_loss(emb_a, emb_b, negatives, temperature=temperature,
                             use_hard_negatives=True)
    assert jnp.allclose(loss_hn, ref_hn, rtol=1e-5, atol=1e-5), (loss_hn, ref_hn)

    # Case 3: batch not a multiple of the row tile (exercises padding masks).
    emb_c = jax.random.normal(kc, (10, 32), dtype=jnp.float32)
    emb_d = jax.random.normal(kd, (10, 32), dtype=jnp.float32)
    loss_pad = jax.block_until_ready(
        contrastive_loss(emb_c, emb_d, temperature=temperature))
    ref_pad = _reference_loss(emb_c, emb_d, temperature=temperature)
    assert jnp.allclose(loss_pad, ref_pad, rtol=1e-5, atol=1e-5), (loss_pad, ref_pad)

    # Case 4: forced multi-step grid (exercises the cross-tile accumulator).
    emb_e = jnp.concatenate([emb_a, emb_a * 0.5 + 1.0], axis=0)   # (16, 32)
    emb_f = jnp.concatenate([emb_b, emb_b * 0.5 - 1.0], axis=0)   # (16, 32)
    loss_grid = jax.block_until_ready(
        contrastive_loss(emb_e, emb_f, negatives, temperature=temperature,
                         use_hard_negatives=True, row_block=8))
    ref_grid = _reference_loss(emb_e, emb_f, negatives, temperature=temperature,
                               use_hard_negatives=True)
    assert jnp.allclose(loss_grid, ref_grid, rtol=1e-5, atol=1e-5), (loss_grid, ref_grid)

    # Case 5: ragged everything — batch=10, 6 negatives, multi-step grid
    # (exercises b padding, negative padding, and the combined column mask).
    neg_small = jax.random.normal(ke, (6, 32), dtype=jnp.float32)
    loss_rag = jax.block_until_ready(
        contrastive_loss(emb_c, emb_d, neg_small, temperature=temperature,
                         use_hard_negatives=True, row_block=8))
    ref_rag = _reference_loss(emb_c, emb_d, neg_small, temperature=temperature,
                              use_hard_negatives=True)
    assert jnp.allclose(loss_rag, ref_rag, rtol=1e-5, atol=1e-5), (loss_rag, ref_rag)

    print("KERNEL_OK")
</pallas_src>

<mosaic_0001>
module attributes {stable_mosaic.version = 11 : i64} {
  func.func @_contrastive_kernel(%arg0: i32, %arg1: memref<8x32xf32, #tpu.memory_space<vmem>>, %arg2: memref<8x32xf32, #tpu.memory_space<vmem>>, %arg3: memref<1x1xf32, #tpu.memory_space<vmem>>, %arg4: memref<1x1xf32, #tpu.memory_space<vmem>>, %arg5: memref<8x32xf32, #tpu.memory_space<vmem>>) attributes {dimension_semantics = [#tpu.dimension_semantics<arbitrary>], iteration_bounds = array<i64: 1>, scalar_prefetch = 0 : i64, scratch_operands = 2 : i64, tpu.core_type = #tpu.core_type<tc>, window_params = [{transform_indices = @transform_0, window_bounds = array<i64: 8, 32>}, {pipeline_mode = #tpu.pipeline_mode<synchronous>, transform_indices = @transform_1, window_bounds = array<i64: 8, 32>}, {pipeline_mode = #tpu.pipeline_mode<synchronous>, transform_indices = @transform_2, window_bounds = array<i64: 1, 1>}]} {
    %c0_i32 = arith.constant 0 : i32
    %0 = arith.cmpi eq, %arg0, %c0_i32 : i32
    %1 = arith.extui %0 : i1 to i32
    %c0_i32_0 = arith.constant 0 : i32
    %2 = arith.cmpi ne, %1, %c0_i32_0 : i32
    scf.if %2 {
      %cst_18 = arith.constant 0.000000e+00 : f32
      %44 = vector.broadcast %cst_18 : f32 to vector<1x1xf32>
      %c0_19 = arith.constant 0 : index
      %c0_20 = arith.constant 0 : index
      %45 = vector.load %arg4[%c0_19, %c0_20] : memref<1x1xf32, #tpu.memory_space<vmem>>, vector<1x1xf32>
      tpu.vector_store %arg4[%c0_19, %c0_20], %44 {strides = array<i32>} : memref<1x1xf32, #tpu.memory_space<vmem>>, vector<1x1xf32>,
      %c0_21 = arith.constant 0 : index
      %c0_22 = arith.constant 0 : index
      %46 = vector.load %arg2[%c0_21, %c0_22] : memref<8x32xf32, #tpu.memory_space<vmem>>, vector<8x32xf32>
      %47 = arith.mulf %46, %46 : vector<8x32xf32>
      %cst_23 = arith.constant dense<0.000000e+00> : vector<8xf32>
      %48 = vector.multi_reduction <add>, %47, %cst_23 [1] : vector<8x32xf32> to vector<8xf32>
      %49 = vector.shape_cast %48 : vector<8xf32> to vector<8x1xf32>
      %cst_24 = arith.constant 1.000000e-24 : f32
      %50 = vector.broadcast %cst_24 : f32 to vector<8x1xf32>
      %51 = arith.maximumf %49, %50 : vector<8x1xf32>
      %52 = math.rsqrt %51 : vector<8x1xf32>
      %53 = vector.broadcast %52 : vector<8x1xf32> to vector<8x32xf32>
      %54 = arith.mulf %46, %53 : vector<8x32xf32>
      %c0_25 = arith.constant 0 : index
      %c0_26 = arith.constant 0 : index
      %55 = vector.load %arg5[%c0_25, %c0_26] : memref<8x32xf32, #tpu.memory_space<vmem>>, vector<8x32xf32>
      tpu.vector_store %arg5[%c0_25, %c0_26], %54 {strides = array<i32>} : memref<8x32xf32, #tpu.memory_space<vmem>>, vector<8x32xf32>,
    } else {
    }
    %c0 = arith.constant 0 : index
    %c0_1 = arith.constant 0 : index
    %3 = vector.load %arg1[%c0, %c0_1] : memref<8x32xf32, #tpu.memory_space<vmem>>, vector<8x32xf32>
    %4 = arith.mulf %3, %3 : vector<8x32xf32>
    %cst = arith.constant dense<0.000000e+00> : vector<8xf32>
    %5 = vector.multi_reduction <add>, %4, %cst [1] : vector<8x32xf32> to vector<8xf32>
    %6 = vector.shape_cast %5 : vector<8xf32> to vector<8x1xf32>
    %cst_2 = arith.constant 1.000000e-24 : f32
    %7 = vector.broadcast %cst_2 : f32 to vector<8x1xf32>
    %8 = arith.maximumf %6, %7 : vector<8x1xf32>
    %9 = math.rsqrt %8 : vector<8x1xf32>
    %10 = vector.broadcast %9 : vector<8x1xf32> to vector<8x32xf32>
    %11 = arith.mulf %3, %10 : vector<8x32xf32>
    %cst_3 = arith.constant 14.2857141 : f32
    %12 = vector.broadcast %cst_3 : f32 to vector<8x32xf32>
    %13 = arith.mulf %11, %12 : vector<8x32xf32>
    %c0_4 = arith.constant 0 : index
    %c0_5 = arith.constant 0 : index
    %14 = vector.load %arg5[%c0_4, %c0_5] : memref<8x32xf32, #tpu.memory_space<vmem>>, vector<8x32xf32>
    %cst_6 = arith.constant dense<0.000000e+00> : vector<8x8xf32>
    %15 = tpu.matmul %13, %14, %cst_6 {dimension_numbers = #tpu.dot_dimension_numbers<[1], [1], [0], [0], [0, 0, 1, 0], [], []>} : vector<8x32xf32>, vector<8x32xf32>, vector<8x8xf32> -> vector<8x8xf32>
    %c8_i32 = arith.constant 8 : i32
    %16 = arith.muli %arg0, %c8_i32 : i32
    %17 = tpu.assume_multiple %16, 8 : i32
    %18 = arith.index_cast %17 : i32 to index
    %c0_7 = arith.constant 0 : index
    %19 = vector.load %arg5[%18, %c0_7] : memref<8x32xf32, #tpu.memory_space<vmem>>, vector<8x32xf32>
    %20 = arith.mulf %13, %19 : vector<8x32xf32>
    %cst_8 = arith.constant dense<0.000000e+00> : vector<8xf32>
    %21 = vector.multi_reduction <add>, %20, %cst_8 [1] : vector<8x32xf32> to vector<8xf32>
    %22 = vector.shape_cast %21 : vector<8xf32> to vector<8x1xf32>
    %cst_9 = arith.constant dense<0xFF800000> : vector<8xf32>
    %23 = vector.multi_reduction <maximumf>, %15, %cst_9 [1] : vector<8x8xf32> to vector<8xf32>
    %24 = vector.shape_cast %23 : vector<8xf32> to vector<8x1xf32>
    %25 = vector.broadcast %24 : vector<8x1xf32> to vector<8x8xf32>
    %26 = arith.subf %15, %25 : vector<8x8xf32>
    %27 = math.exp %26 : vector<8x8xf32>
    %cst_10 = arith.constant dense<0.000000e+00> : vector<8xf32>
    %28 = vector.multi_reduction <add>, %27, %cst_10 [1] : vector<8x8xf32> to vector<8xf32>
    %29 = vector.shape_cast %28 : vector<8xf32> to vector<8x1xf32>
    %30 = math.log %29 : vector<8x1xf32>
    %31 = arith.addf %30, %24 : vector<8x1xf32>
    %32 = arith.subf %31, %22 : vector<8x1xf32>
    %c0_11 = arith.constant 0 : index
    %c0_12 = arith.constant 0 : index
    %33 = vector.load %arg4[%c0_11, %c0_12] : memref<1x1xf32, #tpu.memory_space<vmem>>, vector<1x1xf32>
    %34 = vector.shape_cast %32 : vector<8x1xf32> to vector<1x8x1xf32>
    %cst_13 = arith.constant dense<0.000000e+00> : vector<1xf32>
    %35 = vector.multi_reduction <add>, %34, %cst_13 [1, 2] : vector<1x8x1xf32> to vector<1xf32>
    %36 = vector.shape_cast %35 : vector<1xf32> to vector<1x1x1xf32>
    %37 = vector.extract %36[0, 0, 0] : f32 from vector<1x1x1xf32>
    %38 = vector.broadcast %37 : f32 to vector<1x1xf32>
    %39 = arith.addf %33, %38 : vector<1x1xf32>
    %c0_14 = arith.constant 0 : index
    %c0_15 = arith.constant 0 : index
    %40 = vector.load %arg4[%c0_14, %c0_15] : memref<1x1xf32, #tpu.memory_space<vmem>>, vector<1x1xf32>
    tpu.vector_store %arg4[%c0_14, %c0_15], %39 {strides = array<i32>} : memref<1x1xf32, #tpu.memory_space<vmem>>, vector<1x1xf32>,
    %c0_i32_16 = arith.constant 0 : i32
    %41 = arith.cmpi eq, %arg0, %c0_i32_16 : i32
    %42 = arith.extui %41 : i1 to i32
    %c0_i32_17 = arith.constant 0 : i32
    %43 = arith.cmpi ne, %42, %c0_i32_17 : i32
    scf.if %43 {
      %c0_18 = arith.constant 0 : index
      %c0_19 = arith.constant 0 : index
      %44 = vector.load %arg4[%c0_18, %c0_19] : memref<1x1xf32, #tpu.memory_space<vmem>>, vector<1x1xf32>
      %cst_20 = arith.constant 1.250000e-01 : f32
      %45 = vector.broadcast %cst_20 : f32 to vector<1x1xf32>
      %46 = arith.mulf %44, %45 : vector<1x1xf32>
      %c0_21 = arith.constant 0 : index
      %c0_22 = arith.constant 0 : index
      %47 = vector.load %arg3[%c0_21, %c0_22] : memref<1x1xf32, #tpu.memory_space<vmem>>, vector<1x1xf32>
      tpu.vector_store %arg3[%c0_21, %c0_22], %46 {strides = array<i32>} : memref<1x1xf32, #tpu.memory_space<vmem>>, vector<1x1xf32>,
    } else {
    }
    return
  }
  func.func @transform_0(%arg0: i32) -> (i32, i32) {
    %c0_i32 = arith.constant 0 : i32
    %c0_i32_0 = arith.constant 0 : i32
    return %arg0, %c0_i32 : i32, i32
  }
  func.func @transform_1(%arg0: i32) -> (i32, i32) {
    %c0_i32 = arith.constant 0 : i32
    %c0_i32_0 = arith.constant 0 : i32
    %c0_i32_1 = arith.constant 0 : i32
    return %c0_i32, %c0_i32_0 : i32, i32
  }
  func.func @transform_2(%arg0: i32) -> (i32, i32) {
    %c0_i32 = arith.constant 0 : i32
    %c0_i32_0 = arith.constant 0 : i32
    %c0_i32_1 = arith.constant 0 : i32
    return %c0_i32, %c0_i32_0 : i32, i32
  }
}

</mosaic_0001>

<llo_original>
// kernel: tpu_custom_call.1
$region0: #{tpu_custom_call.1}
  #allocation0 [shape = 'u32[]', space=smem, size = 0x4, offset = 0x4, fixed_abs, tag = 'smem constant byte address 0x4 - core index']
  #allocation1 [shape = 'u32[144,128]{1,0:T(1,128)}', space=vmem, size = 0x12000, scoped, tag = 'internal scratch']
  #allocation2 [shape = 'f32[1,1]{1,0:T(1,128)}', space=vmem, size = 0x200, scoped, tag = 'scratch operand']
  #allocation3 [shape = 'f32[8,32]{1,0:T(8,128)}', space=vmem, size = 0x1000, scoped, tag = 'scratch operand']
  %s0 = inlined_call_operand.hbm [shape: f32[8,32], index: 0, kind: input, shape index: {}]
  %s1 = inlined_call_operand.hbm [shape: f32[8,32], index: 1, kind: input, shape index: {}]
  %s2 = inlined_call_operand.hbm [shape: f32[1,1], index: 2, kind: output, shape index: {}]
  %s3 = sld [smem:[#allocation0]]
  $region34: #{tpu_custom_call.1} parent=0
    _
  %s5 = ssub.s32 1, %s3
  %s6 = scalar_select 0, %s5, %s3
  $region1: #{tpu_custom_call.1} parent=0
    #allocation4 [shape = 'u8[4096]{0}', space=vmem, size = 0x1000, scoped, tag = 'input window, operand 0, single buffered']
    #allocation5 [shape = 's32[1]{0}', space=sflag, size = 0x4, scoped, tag = 'scoped memory for tpu_custom_call.1']
    #allocation6 [shape = 's32[1]{0}', space=sflag, size = 0x4, scoped, tag = 'scoped memory for tpu_custom_call.1']
    #allocation7 [shape = 'u8[4096]{0}', space=vmem, size = 0x1000, scoped, tag = 'input window, operand 1, single buffered']
    #allocation8 [shape = 's32[1]{0}', space=sflag, size = 0x4, scoped, tag = 'scoped memory for tpu_custom_call.1']
    #allocation9 [shape = 'u8[512]{0}', space=vmem, size = 0x400, scoped, tag = 'output window, operand 0, single buffered']
    %7 = vsyncpa [#allocation5], 0
    %8 = vsyncpa [#allocation8], 0
    %9 = vsyncpa [#allocation6], 0
    // Predicated region
    $region2: #{tpu_custom_call.1} parent=1 // pred_check
      _
    $region3: #{tpu_custom_call.1} parent=1 // pred_check_branch
      %11 = sbr.rel (0) target = $region5
    $region4: #{tpu_custom_call.1} parent=1 // pred_region
      %s13 = ssub.s32 128, 128
      %14 = vsyncadd [#allocation5], %s13
      %s16 = sshll.u32 [#allocation4], 4
      %s17 = int_to_ptr.vmem [resolvable:$true] %s16
      %19 = dma.hbm_to_vmem [thread:$0]  %s0, 128, %s17, [#allocation5]
    $region5: #{tpu_custom_call.1} parent=1 // pred_fallthru
      _
    // Predicated region
    $region6: #{tpu_custom_call.1} parent=1 // pred_check
      _
    $region7: #{tpu_custom_call.1} parent=1 // pred_check_branch
      %21 = sbr.rel (0) target = $region9
    $region8: #{tpu_custom_call.1} parent=1 // pred_region
      %s23 = ssub.s32 128, 128
      %24 = vsyncadd [#allocation8], %s23
      %s26 = sshll.u32 [#allocation7], 4
      %s27 = int_to_ptr.vmem [resolvable:$true] %s26
      %29 = dma.hbm_to_vmem [thread:$0]  %s1, 128, %s27, [#allocation8]
    $region9: #{tpu_custom_call.1} parent=1 // pred_fallthru
      _
    // Predicated region
    $region10: #{tpu_custom_call.1} parent=1 // pred_check
      _
    $region11: #{tpu_custom_call.1} parent=1 // pred_check_branch
      %31 = sbr.rel (0) target = $region13
    $region12: #{tpu_custom_call.1} parent=1 // pred_region
      %32 = dma.done [#allocation5], 128
    $region13: #{tpu_custom_call.1} parent=1 // pred_fallthru
      _
    // Predicated region
    $region14: #{tpu_custom_call.1} parent=1 // pred_check
      _
    $region15: #{tpu_custom_call.1} parent=1 // pred_check_branch
      %34 = sbr.rel (0) target = $region17
    $region16: #{tpu_custom_call.1} parent=1 // pred_region
      %35 = dma.done [#allocation8], 128
    $region17: #{tpu_custom_call.1} parent=1 // pred_fallthru
      _
    %p36 = scmp.eq.s32.totalorder 0, 0
    // Predicated region
    $region18: #{tpu_custom_call.1} parent=1 // pred_check
      %p37 = pneg %p36
    $region19: #{tpu_custom_call.1} parent=1 // pred_check_branch
      %39 = sbr.rel (%p37) target = $region21
    $region20: #{tpu_custom_call.1} parent=1 // pred_region
      %vm40 = vcmask 0
      %41 = vst.msk [vmem:[#allocation2] sm:$0x1] %vm40, 0.0
      %v42 = vld [vmem:[#allocation7] sm:$0xff]
      %v43 = vmul.f32 %v42, %v42
      %vm44 = vcmask 261120
      %v45 = vsel %vm44, %v43, 0.0
      %46 = vadd.xlane.f32.xlu0 %v45
      %v47 = vpop.xlane.xlu0 %46
      %v48 = vmax.f32 %v47, 1e-24
      %v49 = vrsqrt.pop %v48
      %v50 = vmul.f32 %v42, %v49
      %51 = vst.msk [vmem:[#allocation3] sm:$0xff] %vm44, %v50
    $region21: #{tpu_custom_call.1} parent=1 // pred_fallthru
      _
    %v52 = vld [vmem:[#allocation4] sm:$0xff]
    %v53 = vmul.f32 %v52, %v52
    %vm54 = vcmask 261120
    %v55 = vsel %vm54, %v53, 0.0
    %56 = vadd.xlane.f32.xlu0 %v55
    %v57 = vpop.xlane.xlu0 %56
    %v58 = vmax.f32 %v57, 1e-24
    %v59 = vrsqrt.pop %v58
    %v60 = vmul.f32 %v52, %v59
    %v61 = vmul.f32 %v60, 14.285714
    %v62 = vld [vmem:[#allocation3] sm:$0xff]
    %v64 = vsel %vm54, %v61, 0
    %v67 = vsel %vm54, %v62, 0
    %69 = vmatprep.subr.mxu0 0.0
    %70 = vmatpush1.xpose.msra.mxu0 %v67
    %71 = vmatprep.subr.mxu0 0.0
    %72 = vmatpush1.xpose.msra.mxu0 0.0
    %73 = vmatprep.subr.mxu0 0.0
    %74 = vmatpush1.xpose.msra.mxu0 0.0
    %75 = vmatprep.subr.mxu0 0.0
    %76 = vmatpush1.xpose.msra.mxu0 0.0
    %77 = vmatprep.subr.mxu0 0.0
    %78 = vmatpush1.xpose.msra.mxu0 0.0
    %79 = vmatprep.subr.mxu0 0.0
    %80 = vmatpush1.xpose.msra.mxu0 0.0
    %81 = vmatprep.subr.mxu0 0.0
    %82 = vmatpush1.xpose.msra.mxu0 0.0
    %83 = vmatprep.subr.mxu0 0.0
    %84 = vmatpush1.xpose.msra.mxu0 0.0
    %85 = vmatprep.subr.mxu0 0.0
    %86 = vmatpush1.xpose.msra.mxu0 0.0
    %87 = vmatprep.subr.mxu0 0.0
    %88 = vmatpush1.xpose.msra.mxu0 0.0
    %89 = vmatprep.subr.mxu0 0.0
    %90 = vmatpush1.xpose.msra.mxu0 0.0
    %91 = vmatprep.subr.mxu0 0.0
    %92 = vmatpush1.xpose.msra.mxu0 0.0
    %93 = vmatprep.subr.mxu0 0.0
    %94 = vmatpush1.xpose.msra.mxu0 0.0
    %95 = vmatprep.subr.mxu0 0.0
    %96 = vmatpush1.xpose.msra.mxu0 0.0
    %97 = vmatprep.subr.mxu0 0.0
    %98 = vmatpush1.xpose.msra.mxu0 0.0
    %99 = vmatprep.subr.mxu0 0.0
    %100 = vmatpush1.xpose.msra.mxu0 0.0
    %101 = vmatprep.subr.mxu0 0.0
    %102 = vmatpush1.xpose.msra.mxu0 0.0
    %103 = vmatprep.subr.mxu0 0.0
    %104 = vmatpush1.xpose.msra.mxu0 0.0
    %105 = vmatprep.subr.mxu0 0.0
    %106 = vmatpush1.xpose.msra.mxu0 0.0
    %107 = vmatprep.subr.mxu0 0.0
    %108 = vmatpush1.xpose.msra.mxu0 0.0
    %109 = vmatprep.subr.mxu0 0.0
    %110 = vmatpush1.xpose.msra.mxu0 0.0
    %111 = vmatprep.subr.mxu0 0.0
    %112 = vmatpush1.xpose.msra.mxu0 0.0
    %113 = vmatprep.subr.mxu0 0.0
    %114 = vmatpush1.xpose.msra.mxu0 0.0
    %115 = vmatprep.subr.mxu0 0.0
    %116 = vmatpush1.xpose.msra.mxu0 0.0
    %117 = vmatprep.subr.mxu0 0.0
    %118 = vmatpush1.xpose.msra.mxu0 0.0
    %119 = vmatprep.subr.mxu0 0.0
    %120 = vmatpush1.xpose.msra.mxu0 0.0
    %121 = vmatprep.subr.mxu0 0.0
    %122 = vmatpush1.xpose.msra.mxu0 0.0
    %123 = vmatprep.subr.mxu0 0.0
    %124 = vmatpush1.xpose.msra.mxu0 0.0
    %125 = vmatprep.subr.mxu0 0.0
    %126 = vmatpush1.xpose.msra.mxu0 0.0
    %127 = vmatprep.subr.mxu0 0.0
    %128 = vmatpush1.xpose.msra.mxu0 0.0
    %129 = vmatprep.subr.mxu0 0.0
    %130 = vmatpush1.xpose.msra.mxu0 0.0
    %131 = vmatprep.subr.mxu0 0.0
    %132 = vmatpush1.xpose.msra.mxu0 0.0
    %133 = vmatprep.mubr.f32.mxu0 0.0
    %134 = vmatmul.mubr.f32.gmra.mrb[0].mxu0 %v64
    %v135 = vpop.f32.mrb[0].mxu0
    %v136 = vadd.f32 0.0, %v135
    %v137 = vpop.f32.mrb[0].mxu0
    %138 = vdwg.mxu0
    %s139 = smul.u32 0, 8
    %s140 = scalar_lea.vmem [#allocation3], %s139
    %v141 = vld [vmem:[%s140] sm:$0xff]
    %v142 = vmul.f32 %v61, %v141
    %v143 = vsel %vm54, %v142, 0.0
    %144 = vadd.xlane.f32.xlu0 %v143
    %v145 = vpop.xlane.xlu0 %144
    %vm146 = vcmask 64512
    %v147 = vsel %vm146, %v136, -inf
    %148 = vmax.xlane.f32.xlu0 %v147
    %v149 = vpop.xlane.xlu0 %148
    %v150 = vsub.f32 %v136, %v149
    %v151 = vmul.f32 %v150, 1.442695
    %v152 = vpow.pop %v151
    %v153 = vsel %vm146, %v152, 0.0
    %154 = vadd.xlane.f32.xlu0 %v153
    %v155 = vpop.xlane.xlu0 %154
    %v156 = vlog2.pop %v155
    %v157 = vmul.f32 %v156, 0.6931472
    %v158 = vadd.f32 %v157, %v149
    %v159 = vsub.f32 %v158, %v145
    %v160 = vld [vmem:[#allocation2] sm:$0x1]
    %vm161 = vcmask 7168
    %v162 = vsel %vm161, %v159, 0.0
    %163 = vadd.xlane.f32.xlu0 %v162
    %v164 = vpop.xlane.xlu0 %163
    %v165 = vrot.slane %v164, 4
    %v166 = vadd.f32 %v164, %v165
    %v167 = vrot.slane %v166, 2
    %v168 = vadd.f32 %v166, %v167
    %v169 = vrot.slane %v168, 1
    %v170 = vadd.f32 %v168, %v169
    %s171 = vtos %v170
    %v172 = vstv %s171
    %v173 = vadd.f32 %v160, %v172
    %vm174 = vcmask 0
    %175 = vst.msk [vmem:[#allocation2] sm:$0x1] %vm174, %v173
    // Predicated region
    $region22: #{tpu_custom_call.1} parent=1 // pred_check
      %p176 = pneg %p36
    $region23: #{tpu_custom_call.1} parent=1 // pred_check_branch
      %178 = sbr.rel (%p176) target = $region25
    $region24: #{tpu_custom_call.1} parent=1 // pred_region
      %v179 = vld [vmem:[#allocation2] sm:$0x1]
      %v180 = vmul.f32 %v179, 0.125
      %181 = vst.msk [vmem:[#allocation9] sm:$0x1] %vm174, %v180
    $region25: #{tpu_custom_call.1} parent=1 // pred_fallthru
      _
    // Predicated region
    $region26: #{tpu_custom_call.1} parent=1 // pred_check
      _
    $region27: #{tpu_custom_call.1} parent=1 // pred_check_branch
      %183 = sbr.rel (0) target = $region29
    $region28: #{tpu_custom_call.1} parent=1 // pred_region
      %s185 = ssub.s32 16, 16
      %186 = vsyncadd [#allocation6], %s185
      %s188 = sshll.u32 [#allocation9], 4
      %s189 = int_to_ptr.vmem [resolvable:$true] %s188
      %191 = dma.vmem_to_hbm [thread:$0]  %s189, 16, %s2, [#allocation6]
    $region29: #{tpu_custom_call.1} parent=1 // pred_fallthru
      _
    // Predicated region
    $region30: #{tpu_custom_call.1} parent=1 // pred_check
      _
    $region31: #{tpu_custom_call.1} parent=1 // pred_check_branch
      %193 = sbr.rel (0) target = $region33
    $region32: #{tpu_custom_call.1} parent=1 // pred_region
      %194 = dma.done [#allocation6], 16
    $region33: #{tpu_custom_call.1} parent=1 // pred_fallthru
      _
    %195 = vsyncpa [#allocation5], 1
    %196 = vsyncpa [#allocation8], 1
    %197 = vsyncpa [#allocation6], 1

</llo_original>
